<compile_context>
chip_gen: v7x
topology: tpu7x:2x2x1
jax: 0.10.0
libtpu: 0.0.40
codegen_flags: <defaults>
</compile_context>

<pallas_src>
import functools

import jax
import jax.numpy as jnp
from jax import lax
from jax.experimental import pallas as pl
from jax.experimental.pallas import tpu as pltpu


def _round_up(n, m):
    return (n + m - 1) // m * m


def _pad_to(a, shape):
    if a.shape == tuple(shape):
        return a
    return jnp.pad(a, [(0, s - d) for d, s in zip(a.shape, shape)])


# ----------------------------------------------------------------------------
# Fused kernel: relu(x@W1+b1) -> drop -> relu(@W2+b2) -> drop -> relu(@W3+b3)
# ----------------------------------------------------------------------------
def _prenet_kernel(seed_ref, x_ref, w1_ref, b1_ref, w2_ref, b2_ref,
                   w3_ref, b3_ref, o_ref, *, p_drop, tile):
    # x_ref : (tile, nmels)  input dtype (f32), cast to bf16 before first dot
    # w*_ref: bf16 weights (VMEM-resident across grid steps, constant index_maps)
    # b*_ref: (1, H_pad) f32 biases
    # o_ref : (tile, Hout_pad) output dtype (bf16 by default)
    use_drop = 0.0 < p_drop < 1.0
    drop_all = p_drop >= 1.0

    if use_drop:
        inv_keep = jnp.float32(1.0 / (1.0 - p_drop))
        bn_lanes = w1_ref.shape[1]
        row0 = pl.program_id(0) * tile
        rows_u = (lax.broadcasted_iota(jnp.int32, (tile, bn_lanes), 0)
                  + row0).astype(jnp.uint32)
        cols_u = lax.broadcasted_iota(jnp.int32, (tile, bn_lanes), 1
                                      ).astype(jnp.uint32)
        seed_u = seed_ref[0].astype(jnp.uint32)

    def dropout(h, layer_id):
        if drop_all:
            return jnp.zeros_like(h)
        if not use_drop:
            return h
        # Counter-based hash PRNG (murmur3 finalizer) — pure VPU integer ops.
        k = ((seed_u * jnp.uint32(0x9E3779B9))
             ^ (rows_u * jnp.uint32(0x85EBCA6B))
             ^ (cols_u * jnp.uint32(0xC2B2AE35))
             ^ jnp.uint32((layer_id * 0x27D4EB2F) & 0xFFFFFFFF))
        k ^= k >> 16
        k *= jnp.uint32(0x85EBCA6B)
        k ^= k >> 13
        k *= jnp.uint32(0xC2B2AE35)
        k ^= k >> 16
        # 24-bit uniform in [0, 1)
        u = (k >> 8).astype(jnp.int32).astype(jnp.float32) * jnp.float32(1.0 / (1 << 24))
        return h * jnp.where(u >= jnp.float32(p_drop), inv_keep, jnp.float32(0.0))

    # Layer 1: nmels -> bottleneck (bf16 MXU, f32 accumulate)
    h = jnp.dot(x_ref[...].astype(w1_ref.dtype), w1_ref[...],
                preferred_element_type=jnp.float32)
    h = jnp.maximum(h + b1_ref[...], 0.0)
    h = dropout(h, 1)

    # Layer 2: bottleneck -> bottleneck
    h = jnp.dot(h.astype(w2_ref.dtype), w2_ref[...],
                preferred_element_type=jnp.float32)
    h = jnp.maximum(h + b2_ref[...], 0.0)
    h = dropout(h, 2)

    # Layer 3: bottleneck -> hidden
    h = jnp.dot(h.astype(w3_ref.dtype), w3_ref[...],
                preferred_element_type=jnp.float32)
    h = jnp.maximum(h + b3_ref[...], 0.0)

    o_ref[...] = h.astype(o_ref.dtype)


# ----------------------------------------------------------------------------
# Wrapper: layout plumbing (flatten rows, pad hidden dims to 128, bf16 weights)
# ----------------------------------------------------------------------------
def decoder_prenet_forward(x, params, *, dropout_p, seed=0, tile_n=1024,
                           out_dtype=jnp.bfloat16):
    """x: (..., nmels) -> (..., hidden) in `out_dtype` (bf16 by default to
    halve the dominant HBM write; pass jnp.float32 for PyTorch-dtype output).
    Dropout is always active (training=True), with inverted 1/(1-p) scaling."""
    lead = x.shape[:-1]
    nmels = x.shape[-1]
    x2 = x.reshape(-1, nmels)
    n_rows = x2.shape[0]

    w1, b1 = params["l1"]
    w2, b2 = params["l2"]
    w3, b3 = params["l3"]
    d_bn = w1.shape[0]      # bottleneck_size
    d_h = w3.shape[0]       # hidden_size

    bn_p = _round_up(d_bn, 128)   # lane-pad hidden dims (full MXU lanes,
    h_p = _round_up(d_h, 128)     #  unmasked lane-dense output stores)

    # Row tiling: minimal sublane padding (multiple of 8); tile divides n_pad;
    # force >= 2 grid steps when possible so v7x's two TensorCores share the
    # "parallel" row axis.
    n_pad8 = max(8, _round_up(n_rows, 8))
    tile = min(_round_up(tile_n, 8), n_pad8)
    if n_pad8 >= 16 and n_pad8 // tile < 2:
        tile = _round_up((n_pad8 + 1) // 2, 8)
    n_pad = _round_up(n_pad8, tile)

    # x enters un-padded along channels (full-extent last dim < 128 is legal)
    # and un-cast: the bf16 cast happens in-kernel -> no inflated HBM copy.
    x_p = _pad_to(x2, (n_pad, nmels))

    # Tiny weights/biases: bf16 for the MXU; constant index_maps keep them
    # resident in VMEM across grid steps.
    w1_p = _pad_to(w1.T, (nmels, bn_p)).astype(jnp.bfloat16)
    w2_p = _pad_to(w2.T, (bn_p, bn_p)).astype(jnp.bfloat16)
    w3_p = _pad_to(w3.T, (bn_p, h_p)).astype(jnp.bfloat16)
    b1_p = _pad_to(b1[None, :], (1, bn_p)).astype(jnp.float32)
    b2_p = _pad_to(b2[None, :], (1, bn_p)).astype(jnp.float32)
    b3_p = _pad_to(b3[None, :], (1, h_p)).astype(jnp.float32)

    seed_arr = jnp.asarray([seed], dtype=jnp.int32)
    kernel = functools.partial(_prenet_kernel, p_drop=float(dropout_p), tile=tile)

    out = pl.pallas_call(
        kernel,
        out_shape=jax.ShapeDtypeStruct((n_pad, h_p), out_dtype),
        grid_spec=pltpu.PrefetchScalarGridSpec(
            num_scalar_prefetch=1,
            grid=(n_pad // tile,),
            in_specs=[
                pl.BlockSpec((tile, nmels), lambda i, s: (i, 0)),   # x tile
                pl.BlockSpec((nmels, bn_p), lambda i, s: (0, 0)),   # W1 (resident)
                pl.BlockSpec((1, bn_p), lambda i, s: (0, 0)),       # b1
                pl.BlockSpec((bn_p, bn_p), lambda i, s: (0, 0)),    # W2
                pl.BlockSpec((1, bn_p), lambda i, s: (0, 0)),       # b2
                pl.BlockSpec((bn_p, h_p), lambda i, s: (0, 0)),     # W3
                pl.BlockSpec((1, h_p), lambda i, s: (0, 0)),        # b3
            ],
            out_specs=pl.BlockSpec((tile, h_p), lambda i, s: (i, 0)),
        ),
        compiler_params=pltpu.CompilerParams(
            dimension_semantics=("parallel",),
        ),
    )(seed_arr, x_p, w1_p, b1_p, w2_p, b2_p, w3_p, b3_p)

    if n_pad != n_rows or h_p != d_h:
        out = out[:n_rows, :d_h]
    return out.reshape(*lead, d_h)


# ----------------------------------------------------------------------------
# Deterministic synthetic parameters (PyTorch nn.Linear layout: W (out, in))
# ----------------------------------------------------------------------------
def make_prenet_params(key, nmels, bottleneck_size=32, hidden_size=256):
    ks = jax.random.split(key, 6)

    def linear(kw, kb, fan_in, fan_out):
        bound = 1.0 / (fan_in ** 0.5)
        w = jax.random.uniform(kw, (fan_out, fan_in), jnp.float32, -bound, bound)
        b = jax.random.uniform(kb, (fan_out,), jnp.float32, -bound, bound)
        return w, b

    return {
        "l1": linear(ks[0], ks[1], nmels, bottleneck_size),
        "l2": linear(ks[2], ks[3], bottleneck_size, bottleneck_size),
        "l3": linear(ks[4], ks[5], bottleneck_size, hidden_size),
    }


if __name__ == "__main__":
    B, T, NMELS, BOTTLENECK, HIDDEN = 2, 16, 8, 32, 32
    DROPOUT = 0.5

    key = jax.random.PRNGKey(0)
    kx, kp = jax.random.split(key)
    x = jax.random.normal(kx, (B, T, NMELS), jnp.float32)
    params = make_prenet_params(kp, NMELS, bottleneck_size=BOTTLENECK,
                                hidden_size=HIDDEN)

    out = decoder_prenet_forward(x, params, dropout_p=DROPOUT, seed=0)
    out = jax.block_until_ready(out)
    assert out.shape == (B, T, HIDDEN), out.shape
    assert bool(jnp.all(out >= 0.0))  # final ReLU (dropout zeros stay >= 0)
    print("KERNEL_OK")
</pallas_src>

<mosaic_0001>
module attributes {stable_mosaic.version = 11 : i64} {
  func.func @_prenet_kernel(%arg0: i32, %arg1: memref<1xi32, #tpu.memory_space<smem>>, %arg2: memref<16x8xf32, #tpu.memory_space<vmem>>, %arg3: memref<8x128xbf16, #tpu.memory_space<vmem>>, %arg4: memref<1x128xf32, #tpu.memory_space<vmem>>, %arg5: memref<128x128xbf16, #tpu.memory_space<vmem>>, %arg6: memref<1x128xf32, #tpu.memory_space<vmem>>, %arg7: memref<128x128xbf16, #tpu.memory_space<vmem>>, %arg8: memref<1x128xf32, #tpu.memory_space<vmem>>, %arg9: memref<16x128xbf16, #tpu.memory_space<vmem>>) attributes {dimension_semantics = [#tpu.dimension_semantics<parallel>], iteration_bounds = array<i64: 2>, scalar_prefetch = 1 : i64, scratch_operands = 0 : i64, tpu.core_type = #tpu.core_type<tc>, window_params = [{transform_indices = @transform_0, window_bounds = array<i64: 16, 8>}, {pipeline_mode = #tpu.pipeline_mode<synchronous>, transform_indices = @transform_1, window_bounds = array<i64: 8, 128>}, {pipeline_mode = #tpu.pipeline_mode<synchronous>, transform_indices = @transform_2, window_bounds = array<i64: 1, 128>}, {pipeline_mode = #tpu.pipeline_mode<synchronous>, transform_indices = @transform_3, window_bounds = array<i64: 128, 128>}, {pipeline_mode = #tpu.pipeline_mode<synchronous>, transform_indices = @transform_4, window_bounds = array<i64: 1, 128>}, {pipeline_mode = #tpu.pipeline_mode<synchronous>, transform_indices = @transform_5, window_bounds = array<i64: 128, 128>}, {pipeline_mode = #tpu.pipeline_mode<synchronous>, transform_indices = @transform_6, window_bounds = array<i64: 1, 128>}, {transform_indices = @transform_7, window_bounds = array<i64: 16, 128>}]} {
    %c16_i32 = arith.constant 16 : i32
    %0 = arith.muli %arg0, %c16_i32 : i32
    %1 = tpu.iota {dimensions = array<i32: 0>} : vector<16x128xi32>
    %2 = vector.broadcast %0 : i32 to vector<16x128xi32>
    %3 = arith.addi %1, %2 : vector<16x128xi32>
    %4 = tpu.iota {dimensions = array<i32: 1>} : vector<16x128xi32>
    %c0 = arith.constant 0 : index
    %5 = memref.load %arg1[%c0] : memref<1xi32, #tpu.memory_space<smem>>
    %c0_0 = arith.constant 0 : index
    %c0_1 = arith.constant 0 : index
    %6 = vector.load %arg2[%c0_0, %c0_1] : memref<16x8xf32, #tpu.memory_space<vmem>>, vector<16x8xf32>
    %7 = arith.truncf %6 : vector<16x8xf32> to vector<16x8xbf16>
    %c0_2 = arith.constant 0 : index
    %c0_3 = arith.constant 0 : index
    %8 = vector.load %arg3[%c0_2, %c0_3] : memref<8x128xbf16, #tpu.memory_space<vmem>>, vector<8x128xbf16>
    %cst = arith.constant dense<0.000000e+00> : vector<16x128xf32>
    %9 = tpu.matmul %7, %8, %cst {dimension_numbers = #tpu.dot_dimension_numbers<[1], [0], [0], [1], [0, 0, 1, 1], [], []>} : vector<16x8xbf16>, vector<8x128xbf16>, vector<16x128xf32> -> vector<16x128xf32>
    %c0_4 = arith.constant 0 : index
    %c0_5 = arith.constant 0 : index
    %10 = vector.load %arg4[%c0_4, %c0_5] : memref<1x128xf32, #tpu.memory_space<vmem>>, vector<1x128xf32>
    %11 = vector.broadcast %10 : vector<1x128xf32> to vector<16x128xf32>
    %12 = arith.addf %9, %11 : vector<16x128xf32>
    %cst_6 = arith.constant 0.000000e+00 : f32
    %13 = vector.broadcast %cst_6 : f32 to vector<16x128xf32>
    %14 = arith.maximumf %12, %13 : vector<16x128xf32>
    %c-1640531527_i32 = arith.constant -1640531527 : i32
    %15 = arith.muli %5, %c-1640531527_i32 : i32
    %c-2048144789_i32 = arith.constant -2048144789 : i32
    %16 = vector.broadcast %c-2048144789_i32 : i32 to vector<16x128xi32>
    %17 = arith.muli %3, %16 : vector<16x128xi32>
    %18 = vector.broadcast %15 : i32 to vector<16x128xi32>
    %19 = arith.xori %18, %17 : vector<16x128xi32>
    %c-1028477387_i32 = arith.constant -1028477387 : i32
    %20 = vector.broadcast %c-1028477387_i32 : i32 to vector<16x128xi32>
    %21 = arith.muli %4, %20 : vector<16x128xi32>
    %22 = arith.xori %19, %21 : vector<16x128xi32>
    %c668265263_i32 = arith.constant 668265263 : i32
    %23 = vector.broadcast %c668265263_i32 : i32 to vector<16x128xi32>
    %24 = arith.xori %22, %23 : vector<16x128xi32>
    %c16_i32_7 = arith.constant 16 : i32
    %25 = vector.broadcast %c16_i32_7 : i32 to vector<16x128xi32>
    %26 = arith.shrui %24, %25 : vector<16x128xi32>
    %27 = arith.xori %24, %26 : vector<16x128xi32>
    %c-2048144789_i32_8 = arith.constant -2048144789 : i32
    %28 = vector.broadcast %c-2048144789_i32_8 : i32 to vector<16x128xi32>
    %29 = arith.muli %27, %28 : vector<16x128xi32>
    %c13_i32 = arith.constant 13 : i32
    %30 = vector.broadcast %c13_i32 : i32 to vector<16x128xi32>
    %31 = arith.shrui %29, %30 : vector<16x128xi32>
    %32 = arith.xori %29, %31 : vector<16x128xi32>
    %c-1028477387_i32_9 = arith.constant -1028477387 : i32
    %33 = vector.broadcast %c-1028477387_i32_9 : i32 to vector<16x128xi32>
    %34 = arith.muli %32, %33 : vector<16x128xi32>
    %c16_i32_10 = arith.constant 16 : i32
    %35 = vector.broadcast %c16_i32_10 : i32 to vector<16x128xi32>
    %36 = arith.shrui %34, %35 : vector<16x128xi32>
    %37 = arith.xori %34, %36 : vector<16x128xi32>
    %c8_i32 = arith.constant 8 : i32
    %38 = vector.broadcast %c8_i32 : i32 to vector<16x128xi32>
    %39 = arith.shrui %37, %38 : vector<16x128xi32>
    %40 = arith.sitofp %39 : vector<16x128xi32> to vector<16x128xf32>
    %cst_11 = arith.constant 5.96046448E-8 : f32
    %41 = vector.broadcast %cst_11 : f32 to vector<16x128xf32>
    %42 = arith.mulf %40, %41 : vector<16x128xf32>
    %cst_12 = arith.constant 5.000000e-01 : f32
    %43 = vector.broadcast %cst_12 : f32 to vector<16x128xf32>
    %44 = arith.cmpf oge, %42, %43 : vector<16x128xf32>
    %cst_13 = arith.constant 2.000000e+00 : f32
    %cst_14 = arith.constant 0.000000e+00 : f32
    %45 = vector.broadcast %cst_13 : f32 to vector<16x128xf32>
    %46 = vector.broadcast %cst_14 : f32 to vector<16x128xf32>
    %47 = arith.select %44, %45, %46 : vector<16x128xi1>, vector<16x128xf32>
    %48 = arith.mulf %14, %47 : vector<16x128xf32>
    %49 = arith.truncf %48 : vector<16x128xf32> to vector<16x128xbf16>
    %c0_15 = arith.constant 0 : index
    %c0_16 = arith.constant 0 : index
    %50 = vector.load %arg5[%c0_15, %c0_16] : memref<128x128xbf16, #tpu.memory_space<vmem>>, vector<128x128xbf16>
    %cst_17 = arith.constant dense<0.000000e+00> : vector<16x128xf32>
    %51 = tpu.matmul %49, %50, %cst_17 {dimension_numbers = #tpu.dot_dimension_numbers<[1], [0], [0], [1], [0, 0, 1, 1], [], []>} : vector<16x128xbf16>, vector<128x128xbf16>, vector<16x128xf32> -> vector<16x128xf32>
    %c0_18 = arith.constant 0 : index
    %c0_19 = arith.constant 0 : index
    %52 = vector.load %arg6[%c0_18, %c0_19] : memref<1x128xf32, #tpu.memory_space<vmem>>, vector<1x128xf32>
    %53 = vector.broadcast %52 : vector<1x128xf32> to vector<16x128xf32>
    %54 = arith.addf %51, %53 : vector<16x128xf32>
    %cst_20 = arith.constant 0.000000e+00 : f32
    %55 = vector.broadcast %cst_20 : f32 to vector<16x128xf32>
    %56 = arith.maximumf %54, %55 : vector<16x128xf32>
    %c-1640531527_i32_21 = arith.constant -1640531527 : i32
    %57 = arith.muli %5, %c-1640531527_i32_21 : i32
    %c-2048144789_i32_22 = arith.constant -2048144789 : i32
    %58 = vector.broadcast %c-2048144789_i32_22 : i32 to vector<16x128xi32>
    %59 = arith.muli %3, %58 : vector<16x128xi32>
    %60 = vector.broadcast %57 : i32 to vector<16x128xi32>
    %61 = arith.xori %60, %59 : vector<16x128xi32>
    %c-1028477387_i32_23 = arith.constant -1028477387 : i32
    %62 = vector.broadcast %c-1028477387_i32_23 : i32 to vector<16x128xi32>
    %63 = arith.muli %4, %62 : vector<16x128xi32>
    %64 = arith.xori %61, %63 : vector<16x128xi32>
    %c1336530526_i32 = arith.constant 1336530526 : i32
    %65 = vector.broadcast %c1336530526_i32 : i32 to vector<16x128xi32>
    %66 = arith.xori %64, %65 : vector<16x128xi32>
    %c16_i32_24 = arith.constant 16 : i32
    %67 = vector.broadcast %c16_i32_24 : i32 to vector<16x128xi32>
    %68 = arith.shrui %66, %67 : vector<16x128xi32>
    %69 = arith.xori %66, %68 : vector<16x128xi32>
    %c-2048144789_i32_25 = arith.constant -2048144789 : i32
    %70 = vector.broadcast %c-2048144789_i32_25 : i32 to vector<16x128xi32>
    %71 = arith.muli %69, %70 : vector<16x128xi32>
    %c13_i32_26 = arith.constant 13 : i32
    %72 = vector.broadcast %c13_i32_26 : i32 to vector<16x128xi32>
    %73 = arith.shrui %71, %72 : vector<16x128xi32>
    %74 = arith.xori %71, %73 : vector<16x128xi32>
    %c-1028477387_i32_27 = arith.constant -1028477387 : i32
    %75 = vector.broadcast %c-1028477387_i32_27 : i32 to vector<16x128xi32>
    %76 = arith.muli %74, %75 : vector<16x128xi32>
    %c16_i32_28 = arith.constant 16 : i32
    %77 = vector.broadcast %c16_i32_28 : i32 to vector<16x128xi32>
    %78 = arith.shrui %76, %77 : vector<16x128xi32>
    %79 = arith.xori %76, %78 : vector<16x128xi32>
    %c8_i32_29 = arith.constant 8 : i32
    %80 = vector.broadcast %c8_i32_29 : i32 to vector<16x128xi32>
    %81 = arith.shrui %79, %80 : vector<16x128xi32>
    %82 = arith.sitofp %81 : vector<16x128xi32> to vector<16x128xf32>
    %cst_30 = arith.constant 5.96046448E-8 : f32
    %83 = vector.broadcast %cst_30 : f32 to vector<16x128xf32>
    %84 = arith.mulf %82, %83 : vector<16x128xf32>
    %cst_31 = arith.constant 5.000000e-01 : f32
    %85 = vector.broadcast %cst_31 : f32 to vector<16x128xf32>
    %86 = arith.cmpf oge, %84, %85 : vector<16x128xf32>
    %cst_32 = arith.constant 2.000000e+00 : f32
    %cst_33 = arith.constant 0.000000e+00 : f32
    %87 = vector.broadcast %cst_32 : f32 to vector<16x128xf32>
    %88 = vector.broadcast %cst_33 : f32 to vector<16x128xf32>
    %89 = arith.select %86, %87, %88 : vector<16x128xi1>, vector<16x128xf32>
    %90 = arith.mulf %56, %89 : vector<16x128xf32>
    %91 = arith.truncf %90 : vector<16x128xf32> to vector<16x128xbf16>
    %c0_34 = arith.constant 0 : index
    %c0_35 = arith.constant 0 : index
    %92 = vector.load %arg7[%c0_34, %c0_35] : memref<128x128xbf16, #tpu.memory_space<vmem>>, vector<128x128xbf16>
    %cst_36 = arith.constant dense<0.000000e+00> : vector<16x128xf32>
    %93 = tpu.matmul %91, %92, %cst_36 {dimension_numbers = #tpu.dot_dimension_numbers<[1], [0], [0], [1], [0, 0, 1, 1], [], []>} : vector<16x128xbf16>, vector<128x128xbf16>, vector<16x128xf32> -> vector<16x128xf32>
    %c0_37 = arith.constant 0 : index
    %c0_38 = arith.constant 0 : index
    %94 = vector.load %arg8[%c0_37, %c0_38] : memref<1x128xf32, #tpu.memory_space<vmem>>, vector<1x128xf32>
    %95 = vector.broadcast %94 : vector<1x128xf32> to vector<16x128xf32>
    %96 = arith.addf %93, %95 : vector<16x128xf32>
    %cst_39 = arith.constant 0.000000e+00 : f32
    %97 = vector.broadcast %cst_39 : f32 to vector<16x128xf32>
    %98 = arith.maximumf %96, %97 : vector<16x128xf32>
    %99 = arith.truncf %98 : vector<16x128xf32> to vector<16x128xbf16>
    %c0_40 = arith.constant 0 : index
    %c0_41 = arith.constant 0 : index
    %100 = vector.load %arg9[%c0_40, %c0_41] : memref<16x128xbf16, #tpu.memory_space<vmem>>, vector<16x128xbf16>
    tpu.vector_store %arg9[%c0_40, %c0_41], %99 {strides = array<i32>} : memref<16x128xbf16, #tpu.memory_space<vmem>>, vector<16x128xbf16>,
    return
  }
  func.func @transform_0(%arg0: i32, %arg1: memref<1xi32, #tpu.memory_space<smem>>) -> (i32, i32) {
    %c0_i32 = arith.constant 0 : i32
    %c0_i32_0 = arith.constant 0 : i32
    return %arg0, %c0_i32 : i32, i32
  }
  func.func @transform_1(%arg0: i32, %arg1: memref<1xi32, #tpu.memory_space<smem>>) -> (i32, i32) {
    %c0_i32 = arith.constant 0 : i32
    %c0_i32_0 = arith.constant 0 : i32
    %c0_i32_1 = arith.constant 0 : i32
    return %c0_i32, %c0_i32_0 : i32, i32
  }
  func.func @transform_2(%arg0: i32, %arg1: memref<1xi32, #tpu.memory_space<smem>>) -> (i32, i32) {
    %c0_i32 = arith.constant 0 : i32
    %c0_i32_0 = arith.constant 0 : i32
    %c0_i32_1 = arith.constant 0 : i32
    return %c0_i32, %c0_i32_0 : i32, i32
  }
  func.func @transform_3(%arg0: i32, %arg1: memref<1xi32, #tpu.memory_space<smem>>) -> (i32, i32) {
    %c0_i32 = arith.constant 0 : i32
    %c0_i32_0 = arith.constant 0 : i32
    %c0_i32_1 = arith.constant 0 : i32
    return %c0_i32, %c0_i32_0 : i32, i32
  }
  func.func @transform_4(%arg0: i32, %arg1: memref<1xi32, #tpu.memory_space<smem>>) -> (i32, i32) {
    %c0_i32 = arith.constant 0 : i32
    %c0_i32_0 = arith.constant 0 : i32
    %c0_i32_1 = arith.constant 0 : i32
    return %c0_i32, %c0_i32_0 : i32, i32
  }
  func.func @transform_5(%arg0: i32, %arg1: memref<1xi32, #tpu.memory_space<smem>>) -> (i32, i32) {
    %c0_i32 = arith.constant 0 : i32
    %c0_i32_0 = arith.constant 0 : i32
    %c0_i32_1 = arith.constant 0 : i32
    return %c0_i32, %c0_i32_0 : i32, i32
  }
  func.func @transform_6(%arg0: i32, %arg1: memref<1xi32, #tpu.memory_space<smem>>) -> (i32, i32) {
    %c0_i32 = arith.constant 0 : i32
    %c0_i32_0 = arith.constant 0 : i32
    %c0_i32_1 = arith.constant 0 : i32
    return %c0_i32, %c0_i32_0 : i32, i32
  }
  func.func @transform_7(%arg0: i32, %arg1: memref<1xi32, #tpu.memory_space<smem>>) -> (i32, i32) {
    %c0_i32 = arith.constant 0 : i32
    %c0_i32_0 = arith.constant 0 : i32
    return %arg0, %c0_i32 : i32, i32
  }
}

</mosaic_0001>

<llo_original>
// kernel: tpu_custom_call.1
$region0: #{tpu_custom_call.1}
  #allocation0 [shape = 'u32[]', space=smem, size = 0x4, offset = 0x4, fixed_abs, tag = 'smem constant byte address 0x4 - core index']
  #allocation1 [shape = 'u32[144,128]{1,0:T(1,128)}', space=vmem, size = 0x12000, scoped, tag = 'internal scratch']
  #allocation2 [shape = 's32[1]{0}', space=sflag, size = 0x4, scoped, tag = 'scoped memory for tpu_custom_call.1']
  #allocation3 [shape = 's32[1]{0:T(128)S(6)}', space=smem, size = 0x200, scoped, tag = 'prefetched SMEM operand 0']
  %s0 = inlined_call_operand.<no memory space> [shape: s32[1], index: 0, kind: input, shape index: {}]
  %s1 = inlined_call_operand.vmem [shape: f32[32,8], index: 1, kind: input, shape index: {}]
  %s2 = inlined_call_operand.vmem [shape: bf16[8,128], index: 2, kind: input, shape index: {}]
  %s3 = inlined_call_operand.vmem [shape: f32[1,128], index: 3, kind: input, shape index: {}]
  %s4 = inlined_call_operand.hbm [shape: bf16[128,128], index: 4, kind: input, shape index: {}]
  %s5 = inlined_call_operand.vmem [shape: f32[1,128], index: 5, kind: input, shape index: {}]
  %s6 = inlined_call_operand.hbm [shape: bf16[128,128], index: 6, kind: input, shape index: {}]
  %s7 = inlined_call_operand.vmem [shape: f32[1,128], index: 7, kind: input, shape index: {}]
  %s8 = inlined_call_operand.hbm [shape: bf16[32,128], index: 8, kind: output, shape index: {}]
  %s9 = sld [smem:[#allocation0]]
  $region69: #{tpu_custom_call.1} parent=0
    _
  %s11 = ssub.s32 1, %s9
  %s12 = scalar_select 0, %s11, %s9
  %13 = sst [smem:[#allocation3]] %s0
  $region1: #{tpu_custom_call.1} parent=0
    #allocation4 [shape = 'u8[32768]{0}', space=vmem, size = 0x8000, scoped, tag = 'input window, operand 4, single buffered']
    #allocation5 [shape = 's32[2]{0}', space=sflag, size = 0x8, scoped, tag = 'scoped memory for tpu_custom_call.1']
    #allocation6 [shape = 's32[2]{0}', space=sflag, size = 0x8, scoped, tag = 'scoped memory for tpu_custom_call.1']
    #allocation7 [shape = 'u8[32768]{0}', space=vmem, size = 0x8000, scoped, tag = 'input window, operand 6, single buffered']
    #allocation8 [shape = 's32[1]{0}', space=sflag, size = 0x4, scoped, tag = 'scoped memory for tpu_custom_call.1']
    #allocation9 [shape = 'u8[8192]{0}', space=vmem, size = 0x2000, scoped, tag = 'output window, operand 0']
    %14 = vsyncpa [#allocation5], 0
    %15 = vsyncpa [#allocation8], 0
    %16 = vsyncpa [#allocation6], 0
    %s17 = scalar_lea.sflag [#allocation6], 1
    %18 = vsyncpa %s17, 0
    loop: start=0, step=1, limit=4
    $region2: #{tpu_custom_call.1} parent=1 // loop_pre_header
      _
    $region3: #{tpu_custom_call.1} parent=1 // loop_header
      %s20 = sphi 0, %s24
      %p21 = scmp.ge.s32.totalorder %s20, 4
      %s30 = sphi 0, %s32
      %s33 = sphi 0, %s30
      %s34 = sphi 0, %s33
      %s50 = sphi 0, %s34
      %s54 = sphi 0, %s54
      %s56 = sphi 0, %s54
      %s57 = sphi 0, %s56
      %s71 = sphi 0, %s57
      %s75 = sphi 0, %s75
      %s77 = sphi 0, %s75
      %s78 = sphi 0, %s77
      %s92 = sphi 0, %s78
      %s96 = sphi 0, %s96
      %s98 = sphi 0, %s96
      %s99 = sphi 0, %s98
      %s113 = sphi 0, %s99
      %s117 = sphi 0, %s117
      %s119 = sphi 0, %s117
      %s120 = sphi 0, %s119
      %s134 = sphi 0, %s120
      %s138 = sphi 0, %s138
      %s140 = sphi 0, %s138
      %s141 = sphi 0, %s140
      %s155 = sphi 0, %s141
      %s159 = sphi 0, %s159
      %s161 = sphi 0, %s159
      %s162 = sphi 0, %s161
      %s176 = sphi 0, %s162
      %s182 = sphi 0, %s184
      %s185 = sphi 0, %s182
      %s186 = sphi 0, %s185
      %s202 = sphi 0, %s186
    $region4: #{tpu_custom_call.1} parent=1 // loop_header_branch
      %23 = sbr.rel (%p21) target = $region8
    $region5: #{tpu_custom_call.1} parent=1 // loop_body
      %s25 = ssub.s32 %s20, 1
      %s26 = ssub.s32 %s20, 2
      %s27 = sadd.s32 %s20, 1
      %s28 = ssub.s32 %s20, %s27
      %p29 = scmp.eq.s32.totalorder %s28, 0
      %s31 = sadd.s32 %s30, 1
      %s32 = scalar_select %p29, %s30, %s31
      %p35 = pneg %p29
      %p36 = scmp.eq.s32.totalorder %s20, 1
      %p37 = por %p35, %p36
      %p38 = scmp.ne.s32.totalorder %s30, %s33
      %p39 = scmp.eq.s32.totalorder %s20, 0
      %p40 = por %p38, %p39
      %p41 = scmp.ne.s32.totalorder %s30, %s33
      %p42 = scmp.eq.s32.totalorder %s25, 1
      %p43 = por %p41, %p42
      %p44 = scmp.ne.s32.totalorder %s33, %s34
      %p45 = scmp.eq.s32.totalorder %s25, 0
      %p46 = por %p44, %p45
      %p47 = scmp.ne.s32.totalorder %s33, %s34
      %p48 = scmp.eq.s32.totalorder %s26, 1
      %p49 = por %p47, %p48
      %p51 = scmp.ne.s32.totalorder %s34, %s50
      %p52 = scmp.eq.s32.totalorder %s26, 0
      %p53 = por %p51, %p52
      %s55 = sadd.s32 %s54, 1
      %p58 = scmp.eq.s32.totalorder %s20, 1
      %p59 = scmp.ne.s32.totalorder %s54, %s56
      %p60 = scmp.eq.s32.totalorder %s20, 0
      %p61 = por %p59, %p60
      %p62 = scmp.ne.s32.totalorder %s54, %s56
      %p63 = scmp.eq.s32.totalorder %s25, 1
      %p64 = por %p62, %p63
      %p65 = scmp.ne.s32.totalorder %s56, %s57
      %p66 = scmp.eq.s32.totalorder %s25, 0
      %p67 = por %p65, %p66
      %p68 = scmp.ne.s32.totalorder %s56, %s57
      %p69 = scmp.eq.s32.totalorder %s26, 1
      %p70 = por %p68, %p69
      %p72 = scmp.ne.s32.totalorder %s57, %s71
      %p73 = scmp.eq.s32.totalorder %s26, 0
      %p74 = por %p72, %p73
      %s76 = sadd.s32 %s75, 1
      %p79 = scmp.eq.s32.totalorder %s20, 1
      %p80 = scmp.ne.s32.totalorder %s75, %s77
      %p81 = scmp.eq.s32.totalorder %s20, 0
      %p82 = por %p80, %p81
      %p83 = scmp.ne.s32.totalorder %s75, %s77
      %p84 = scmp.eq.s32.totalorder %s25, 1
      %p85 = por %p83, %p84
      %p86 = scmp.ne.s32.totalorder %s77, %s78
      %p87 = scmp.eq.s32.totalorder %s25, 0
      %p88 = por %p86, %p87
      %p89 = scmp.ne.s32.totalorder %s77, %s78
      %p90 = scmp.eq.s32.totalorder %s26, 1
      %p91 = por %p89, %p90
      %p93 = scmp.ne.s32.totalorder %s78, %s92
      %p94 = scmp.eq.s32.totalorder %s26, 0
      %p95 = por %p93, %p94
      %s97 = sadd.s32 %s96, 1
      %p100 = scmp.eq.s32.totalorder %s20, 1
      %p101 = scmp.ne.s32.totalorder %s96, %s98
      %p102 = scmp.eq.s32.totalorder %s20, 0
      %p103 = por %p101, %p102
      %p104 = scmp.ne.s32.totalorder %s96, %s98
      %p105 = scmp.eq.s32.totalorder %s25, 1
      %p106 = por %p104, %p105
      %p107 = scmp.ne.s32.totalorder %s98, %s99
      %p108 = scmp.eq.s32.totalorder %s25, 0
      %p109 = por %p107, %p108
      %p110 = scmp.ne.s32.totalorder %s98, %s99
      %p111 = scmp.eq.s32.totalorder %s26, 1
      %p112 = por %p110, %p111
      %p114 = scmp.ne.s32.totalorder %s99, %s113
      %p115 = scmp.eq.s32.totalorder %s26, 0
      %p116 = por %p114, %p115
      %s118 = sadd.s32 %s117, 1
      %p121 = scmp.eq.s32.totalorder %s20, 1
      %p122 = scmp.ne.s32.totalorder %s117, %s119
      %p123 = scmp.eq.s32.totalorder %s20, 0
      %p124 = por %p122, %p123
      %p125 = scmp.ne.s32.totalorder %s117, %s119
      %p126 = scmp.eq.s32.totalorder %s25, 1
      %p127 = por %p125, %p126
      %p128 = scmp.ne.s32.totalorder %s119, %s120
      %p129 = scmp.eq.s32.totalorder %s25, 0
      %p130 = por %p128, %p129
      %p131 = scmp.ne.s32.totalorder %s119, %s120
      %p132 = scmp.eq.s32.totalorder %s26, 1
      %p133 = por %p131, %p132
      %p135 = scmp.ne.s32.totalorder %s120, %s134
      %p136 = scmp.eq.s32.totalorder %s26, 0
      %p137 = por %p135, %p136
      %s139 = sadd.s32 %s138, 1
      %p142 = scmp.eq.s32.totalorder %s20, 1
      %p143 = scmp.ne.s32.totalorder %s138, %s140
      %p144 = scmp.eq.s32.totalorder %s20, 0
      %p145 = por %p143, %p144
      %p146 = scmp.ne.s32.totalorder %s138, %s140
      %p147 = scmp.eq.s32.totalorder %s25, 1
      %p148 = por %p146, %p147
      %p149 = scmp.ne.s32.totalorder %s140, %s141
      %p150 = scmp.eq.s32.totalorder %s25, 0
      %p151 = por %p149, %p150
      %p152 = scmp.ne.s32.totalorder %s140, %s141
      %p153 = scmp.eq.s32.totalorder %s26, 1
      %p154 = por %p152, %p153
      %p156 = scmp.ne.s32.totalorder %s141, %s155
      %p157 = scmp.eq.s32.totalorder %s26, 0
      %p158 = por %p156, %p157
      %s160 = sadd.s32 %s159, 1
      %p163 = scmp.eq.s32.totalorder %s20, 1
      %p164 = scmp.ne.s32.totalorder %s159, %s161
      %p165 = scmp.eq.s32.totalorder %s20, 0
      %p166 = por %p164, %p165
      %p167 = scmp.ne.s32.totalorder %s159, %s161
      %p168 = scmp.eq.s32.totalorder %s25, 1
      %p169 = por %p167, %p168
      %p170 = scmp.ne.s32.totalorder %s161, %s162
      %p171 = scmp.eq.s32.totalorder %s25, 0
      %p172 = por %p170, %p171
      %p173 = scmp.ne.s32.totalorder %s161, %s162
      %p174 = scmp.eq.s32.totalorder %s26, 1
      %p175 = por %p173, %p174
      %p177 = scmp.ne.s32.totalorder %s162, %s176
      %p178 = scmp.eq.s32.totalorder %s26, 0
      %p179 = por %p177, %p178
      %s180 = ssub.s32 %s20, %s27
      %p181 = scmp.eq.s32.totalorder %s180, 0
      %s183 = sadd.s32 %s182, 1
      %s184 = scalar_select %p181, %s182, %s183
      %p187 = pneg %p181
      %p188 = scmp.eq.s32.totalorder %s20, 1
      %p189 = por %p187, %p188
      %p190 = scmp.ne.s32.totalorder %s182, %s185
      %p191 = scmp.eq.s32.totalorder %s20, 0
      %p192 = por %p190, %p191
      %p193 = scmp.ne.s32.totalorder %s182, %s185
      %p194 = scmp.eq.s32.totalorder %s25, 1
      %p195 = por %p193, %p194
      %p196 = scmp.ne.s32.totalorder %s185, %s186
      %p197 = scmp.eq.s32.totalorder %s25, 0
      %p198 = por %p196, %p197
      %p199 = scmp.ne.s32.totalorder %s185, %s186
      %p200 = scmp.eq.s32.totalorder %s26, 1
      %p201 = por %p199, %p200
      %p203 = scmp.ne.s32.totalorder %s186, %s202
      %p204 = scmp.eq.s32.totalorder %s26, 0
      %p205 = por %p203, %p204
      %p206 = scmp.le.s32.totalorder 1, %s20
      %p207 = scmp.lt.s32.totalorder %s20, 3
      %p208 = pnand %p206, %p207
      %p209 = pneg %p208
      // Predicated region
      $region9: #{tpu_custom_call.1} parent=5 // pred_check
        _
      $region10: #{tpu_custom_call.1} parent=5 // pred_check_branch
        %211 = sbr.rel (%p208) target = $region12
      $region11: #{tpu_custom_call.1} parent=5 // pred_region
        %s212 = ssub.s32 %s20, 1
        // Predicated region
        $region13: #{tpu_custom_call.1} parent=11 // pred_check
          %p213 = pneg %p67
        $region14: #{tpu_custom_call.1} parent=11 // pred_check_branch
          %215 = sbr.rel (%p213) target = $region16
        $region15: #{tpu_custom_call.1} parent=11 // pred_region
          _
        $region16: #{tpu_custom_call.1} parent=11 // pred_fallthru
          _
        // Predicated region
        $region17: #{tpu_custom_call.1} parent=11 // pred_check
          %p216 = pneg %p88
        $region18: #{tpu_custom_call.1} parent=11 // pred_check_branch
          %218 = sbr.rel (%p216) target = $region20
        $region19: #{tpu_custom_call.1} parent=11 // pred_region
          _
        $region20: #{tpu_custom_call.1} parent=11 // pred_fallthru
          _
        // Predicated region
        $region21: #{tpu_custom_call.1} parent=11 // pred_check
          %p219 = pneg %p109
        $region22: #{tpu_custom_call.1} parent=11 // pred_check_branch
          %221 = sbr.rel (%p219) target = $region24
        $region23: #{tpu_custom_call.1} parent=11 // pred_region
          %s223 = ssub.s32 1024, 1024
          %224 = vsyncadd [#allocation5], %s223
          %s225 = sshll.u32 [#allocation4], 4
          %s226 = int_to_ptr.vmem [resolvable:$true] %s225
          %231 = dma.hbm_to_vmem [thread:$0]  %s4, 1024, %s226, [#allocation5], 64, 64, 4
        $region24: #{tpu_custom_call.1} parent=11 // pred_fallthru
          _
        // Predicated region
        $region25: #{tpu_custom_call.1} parent=11 // pred_check
          %p232 = pneg %p130
        $region26: #{tpu_custom_call.1} parent=11 // pred_check_branch
          %234 = sbr.rel (%p232) target = $region28
        $region27: #{tpu_custom_call.1} parent=11 // pred_region
          _
        $region28: #{tpu_custom_call.1} parent=11 // pred_fallthru
          _
        // Predicated region
        $region29: #{tpu_custom_call.1} parent=11 // pred_check
          %p235 = pneg %p151
        $region30: #{tpu_custom_call.1} parent=11 // pred_check_branch
          %237 = sbr.rel (%p235) target = $region32
        $region31: #{tpu_custom_call.1} parent=11 // pred_region
          %s239 = ssub.s32 1024, 1024
          %240 = vsyncadd [#allocation8], %s239
          %s241 = sshll.u32 [#allocation7], 4
          %s242 = int_to_ptr.vmem [resolvable:$true] %s241
          %247 = dma.hbm_to_vmem [thread:$0]  %s6, 1024, %s242, [#allocation8], 64, 64, 4
        $region32: #{tpu_custom_call.1} parent=11 // pred_fallthru
          _
        // Predicated region
        $region33: #{tpu_custom_call.1} parent=11 // pred_check
          %p248 = pneg %p172
        $region34: #{tpu_custom_call.1} parent=11 // pred_check_branch
          %250 = sbr.rel (%p248) target = $region36
        $region35: #{tpu_custom_call.1} parent=11 // pred_region
          _
        $region36: #{tpu_custom_call.1} parent=11 // pred_fallthru
          _
      $region12: #{tpu_custom_call.1} parent=5 // pred_fallthru
        _
      %p251 = scmp.lt.s32.totalorder %s20, 2
      // Predicated region
      $region37: #{tpu_custom_call.1} parent=5 // pred_check
        %p252 = pneg %p251
      $region38: #{tpu_custom_call.1} parent=5 // pred_check_branch
        %254 = sbr.rel (%p252) target = $region40
      $region39: #{tpu_custom_call.1} parent=5 // pred_region
        // Predicated region
        $region41: #{tpu_custom_call.1} parent=39 // pred_check
          %p255 = pneg %p40
        $region42: #{tpu_custom_call.1} parent=39 // pred_check_branch
          %257 = sbr.rel (%p255) target = $region44
        $region43: #{tpu_custom_call.1} parent=39 // pred_region
          %s258 = smul.u32 2, %s20
          %p259 = scmp.lt.s32.totalorder %s258, 3
          %s260 = scalar_select %p259, %s258, 3
          %s261 = smul.addr %s260, 8
          %s262 = scalar_lea.vmem %s1, %s261
          %s263 = smul.u32 2, %s20
        $region44: #{tpu_custom_call.1} parent=39 // pred_fallthru
          _
      $region40: #{tpu_custom_call.1} parent=5 // pred_fallthru
        _
      %p264 = scmp.le.s32.totalorder 1, %s20
      %p265 = scmp.lt.s32.totalorder %s20, 3
      %p266 = pnand %p264, %p265
      %p267 = pneg %p266
      // Predicated region
      $region45: #{tpu_custom_call.1} parent=5 // pred_check
        _
      $region46: #{tpu_custom_call.1} parent=5 // pred_check_branch
        %269 = sbr.rel (%p266) target = $region48
      $region47: #{tpu_custom_call.1} parent=5 // pred_region
        %s270 = ssub.s32 %s20, 1
        // Predicated region
        $region49: #{tpu_custom_call.1} parent=47 // pred_check
          %p271 = pneg %p109
        $region50: #{tpu_custom_call.1} parent=47 // pred_check_branch
          %273 = sbr.rel (%p271) target = $region52
        $region51: #{tpu_custom_call.1} parent=47 // pred_region
          %274 = dma.done [#allocation5], 1024
        $region52: #{tpu_custom_call.1} parent=47 // pred_fallthru
          _
        // Predicated region
        $region53: #{tpu_custom_call.1} parent=47 // pred_check
          %p275 = pneg %p151
        $region54: #{tpu_custom_call.1} parent=47 // pred_check_branch
          %277 = sbr.rel (%p275) target = $region56
        $region55: #{tpu_custom_call.1} parent=47 // pred_region
          %278 = dma.done [#allocation8], 1024
        $region56: #{tpu_custom_call.1} parent=47 // pred_fallthru
          _
        %s279 = smul.u32 2, %s25
        %p280 = scmp.lt.s32.totalorder %s279, 3
        %s281 = scalar_select %p280, %s279, 3
        %s282 = smul.addr %s281, 8
        %s283 = scalar_lea.vmem %s1, %s282
        %p284 = pneg %p46
        %p285 = pneg %p43
        %p286 = pneg %p67
        %p287 = pneg %p64
        %p288 = pneg %p88
        %p289 = pneg %p85
        %p290 = pneg %p109
        %p291 = pneg %p106
        %p292 = pneg %p130
        %p293 = pneg %p127
        %p294 = pneg %p151
        %p295 = pneg %p148
        %p296 = pneg %p172
        %p297 = pneg %p169
        %p298 = pneg %p198
        %p299 = pneg %p195
        %s300 = sand.u32 %s185, 1
        %s301 = scalar_lea.sflag [#allocation6], %s300
        %s302 = sand.u32 %s185, 1
        %s303 = smul.addr %s302, 8
        %s304 = scalar_lea.vmem [#allocation9], %s303
        %s305 = smul.u32 2, %s25
        %p306 = scmp.lt.s32.totalorder %s305, 3
        %s307 = scalar_select %p306, %s305, 3
        %s308 = smul.addr %s307, 8
        %s309 = scalar_lea.vmem %s1, %s308
        %s310 = smul.u32 2, %s25
        %s311 = smul.u32 2, %s25
        %s313 = smul.u32 %s25, 16
        %v314 = vlaneseq
        %v315 = vshrl.u32 %v314, 7
        %v316 = vadd.s32 %v315, 8
        %v317 = vstv %s313
        %v318 = vadd.s32 %v315, %v317
        %v319 = vadd.s32 %v316, %v317
        %v320 = vlaneseq
        %v321 = vand.u32 %v320, 127
        %s322 = sld [smem:[#allocation3]]
        %v323 = vld [vmem:[%s309] sm:$0xff]
        %v324 = vld [vmem:[%s309 + $0x8] sm:$0xff]
        %v325 = vpack.c.bf16 %v324, %v323
        %v326 = vld [vmem:[%s2] sm:$0xf]
        %v327 = vld [vmem:[%s3] sm:$0x1]
        %v329 = vlaneseq
        %v330 = vshrl.u32 %v329, 7
        %v331 = vsub.s32 0, %v330
        %v332 = vrot.slane %v327, %v331
        %vm334 = vcmask 64512
        %v336 = vsel %vm334, %v325, 0
        %vm338 = vcmask 1043456
        %v340 = vsel %vm338, %v326, 0
        %342 = vmatprep.subr.bf16.mxu0 0
        %343 = vmatpush1.bf16.msra.mxu0 %v340
        %344 = vmatprep.subr.bf16.mxu0 0
        %345 = vmatpush1.bf16.msra.mxu0 0
        %346 = vmatprep.subr.bf16.mxu0 0
        %347 = vmatpush1.bf16.msra.mxu0 0
        %348 = vmatprep.subr.bf16.mxu0 0
        %349 = vmatpush1.bf16.msra.mxu0 0
        %350 = vmatprep.subr.bf16.mxu0 0
        %351 = vmatpush1.bf16.msra.mxu0 0
        %352 = vmatprep.subr.bf16.mxu0 0
        %353 = vmatpush1.bf16.msra.mxu0 0
        %354 = vmatprep.subr.bf16.mxu0 0
        %355 = vmatpush1.bf16.msra.mxu0 0
        %356 = vmatprep.subr.bf16.mxu0 0
        %357 = vmatpush1.bf16.msra.mxu0 0
        %358 = vmatprep.subr.bf16.mxu0 0
        %359 = vmatpush1.bf16.msra.mxu0 0
        %360 = vmatprep.subr.bf16.mxu0 0
        %361 = vmatpush1.bf16.msra.mxu0 0
        %362 = vmatprep.subr.bf16.mxu0 0
        %363 = vmatpush1.bf16.msra.mxu0 0
        %364 = vmatprep.subr.bf16.mxu0 0
        %365 = vmatpush1.bf16.msra.mxu0 0
        %366 = vmatprep.subr.bf16.mxu0 0
        %367 = vmatpush1.bf16.msra.mxu0 0
        %368 = vmatprep.subr.bf16.mxu0 0
        %369 = vmatpush1.bf16.msra.mxu0 0
        %370 = vmatprep.subr.bf16.mxu0 0
        %371 = vmatpush1.bf16.msra.mxu0 0
        %372 = vmatprep.subr.bf16.mxu0 0
        %373 = vmatpush1.bf16.msra.mxu0 0
        %374 = vmatprep.mubr.bf16.mxu0 0
        %375 = vmatmul.mubr.bf16.gmra.mrb[0].mxu0 %v336
        %v376 = vpop.f32.mrb[0].mxu0
        %v377 = vadd.f32 %v332, %v376
        %v378 = vpop.f32.mrb[0].mxu0
        %v379 = vpop.f32.mrb[0].mxu0
        %v380 = vadd.f32 %v332, %v379
        %v381 = vpop.f32.mrb[0].mxu0
        %382 = vdwg.mxu0
        %v383 = vmax.f32 %v377, 0.0
        %v384 = vmax.f32 %v380, 0.0
        %s385 = smul.u32 %s322, 2654435769
        %v386 = vmul.u32 %v318, 2246822507
        %v387 = vmul.u32 %v319, 2246822507
        %v388 = vstv %s385
        %v389 = vxor.u32 %v388, %v386
        %v390 = vxor.u32 %v388, %v387
        %v391 = vmul.u32 %v321, 3266489909
        %v392 = vxor.u32 %v389, %v391
        %v393 = vxor.u32 %v390, %v391
        %v394 = vxor.u32 %v392, 668265263
        %v395 = vxor.u32 %v393, 668265263
        %v396 = vshrl.u32 %v394, 16
        %v397 = vshrl.u32 %v395, 16
        %v398 = vxor.u32 %v394, %v396
        %v399 = vxor.u32 %v395, %v397
        %v400 = vmul.u32 %v398, 2246822507
        %v401 = vmul.u32 %v399, 2246822507
        %v402 = vshrl.u32 %v400, 13
        %v403 = vshrl.u32 %v401, 13
        %v404 = vxor.u32 %v400, %v402
        %v405 = vxor.u32 %v401, %v403
        %v406 = vmul.u32 %v404, 3266489909
        %v407 = vmul.u32 %v405, 3266489909
        %v408 = vshrl.u32 %v406, 16
        %v409 = vshrl.u32 %v407, 16
        %v410 = vxor.u32 %v406, %v408
        %v411 = vxor.u32 %v407, %v409
        %v412 = vshrl.u32 %v410, 8
        %v413 = vshrl.u32 %v411, 8
        %v414 = vcvt.s32.f32 %v412
        %v415 = vcvt.s32.f32 %v413
        %v416 = vmul.f32 %v414, 5.9604645e-08
        %v417 = vmul.f32 %v415, 5.9604645e-08
        %vm418 = vcmp.ge.f32.partialorder %v416, 0.5
        %vm419 = vcmp.ge.f32.partialorder %v417, 0.5
        %v420 = vsel %vm418, 2.0, 0.0
        %v421 = vsel %vm419, 2.0, 0.0
        %v422 = vmul.f32 %v383, %v420
        %v423 = vmul.f32 %v384, %v421
        %v424 = vpack.c.bf16 %v423, %v422
        %v425 = vld [vmem:[#allocation4] sm:$0xf]
        %v426 = vld [vmem:[#allocation4 + $0x4] sm:$0xf]
        %v427 = vld [vmem:[#allocation4 + $0x8] sm:$0xf]
        %v428 = vld [vmem:[#allocation4 + $0xc] sm:$0xf]
        %v429 = vld [vmem:[#allocation4 + $0x10] sm:$0xf]
        %v430 = vld [vmem:[#allocation4 + $0x14] sm:$0xf]
        %v431 = vld [vmem:[#allocation4 + $0x18] sm:$0xf]
        %v432 = vld [vmem:[#allocation4 + $0x1c] sm:$0xf]
        %v433 = vld [vmem:[#allocation4 + $0x20] sm:$0xf]
        %v434 = vld [vmem:[#allocation4 + $0x24] sm:$0xf]
        %v435 = vld [vmem:[#allocation4 + $0x28] sm:$0xf]
        %v436 = vld [vmem:[#allocation4 + $0x2c] sm:$0xf]
        %v437 = vld [vmem:[#allocation4 + $0x30] sm:$0xf]
        %v438 = vld [vmem:[#allocation4 + $0x34] sm:$0xf]
        %v439 = vld [vmem:[#allocation4 + $0x38] sm:$0xf]
        %v440 = vld [vmem:[#allocation4 + $0x3c] sm:$0xf]
        %v441 = vld [vmem:[%s5] sm:$0x1]
        %v443 = vlaneseq
        %v444 = vshrl.u32 %v443, 7
        %v445 = vsub.s32 0, %v444
        %v446 = vrot.slane %v441, %v445
        %v464 = vunpack.c.l.b16 %v425
        %v465 = vunpack.c.l.b16 %v426
        %v466 = vunpack.c.l.b16 %v427
        %v467 = vunpack.c.l.b16 %v428
        %v468 = vunpack.c.l.b16 %v429
        %v469 = vunpack.c.l.b16 %v430
        %v470 = vunpack.c.l.b16 %v431
        %v471 = vunpack.c.l.b16 %v432
        %v472 = vunpack.c.l.b16 %v433
        %v473 = vunpack.c.l.b16 %v434
        %v474 = vunpack.c.l.b16 %v435
        %v475 = vunpack.c.l.b16 %v436
        %v476 = vunpack.c.l.b16 %v437
        %v477 = vunpack.c.l.b16 %v438
        %v478 = vunpack.c.l.b16 %v439
        %v479 = vunpack.c.l.b16 %v440
        %v480 = vpack.c.b16 %v465, %v464
        %v481 = vpack.c.b16 %v467, %v466
        %v482 = vpack.c.b16 %v469, %v468
        %v483 = vpack.c.b16 %v471, %v470
        %v484 = vpack.c.b16 %v473, %v472
        %v485 = vpack.c.b16 %v475, %v474
        %v486 = vpack.c.b16 %v477, %v476
        %v487 = vpack.c.b16 %v479, %v478
        %496 = vmatprep.subr.bf16.mxu0 0
        %497 = vmatpush1.bf16.msra.mxu0 %v480
        %498 = vmatprep.subr.bf16.mxu0 0
        %499 = vmatpush1.bf16.msra.mxu0 %v481
        %500 = vmatprep.subr.bf16.mxu0 0
        %501 = vmatpush1.bf16.msra.mxu0 %v482
        %502 = vmatprep.subr.bf16.mxu0 0
        %503 = vmatpush1.bf16.msra.mxu0 %v483
        %504 = vmatprep.subr.bf16.mxu0 0
        %505 = vmatpush1.bf16.msra.mxu0 %v484
        %506 = vmatprep.subr.bf16.mxu0 0
        %507 = vmatpush1.bf16.msra.mxu0 %v485
        %508 = vmatprep.subr.bf16.mxu0 0
        %509 = vmatpush1.bf16.msra.mxu0 %v486
        %510 = vmatprep.subr.bf16.mxu0 0
        %511 = vmatpush1.bf16.msra.mxu0 %v487
        %512 = vmatprep.subr.bf16.mxu0 0
        %513 = vmatpush1.bf16.msra.mxu0 0
        %514 = vmatprep.subr.bf16.mxu0 0
        %515 = vmatpush1.bf16.msra.mxu0 0
        %516 = vmatprep.subr.bf16.mxu0 0
        %517 = vmatpush1.bf16.msra.mxu0 0
        %518 = vmatprep.subr.bf16.mxu0 0
        %519 = vmatpush1.bf16.msra.mxu0 0
        %520 = vmatprep.subr.bf16.mxu0 0
        %521 = vmatpush1.bf16.msra.mxu0 0
        %522 = vmatprep.subr.bf16.mxu0 0
        %523 = vmatpush1.bf16.msra.mxu0 0
        %524 = vmatprep.subr.bf16.mxu0 0
        %525 = vmatpush1.bf16.msra.mxu0 0
        %526 = vmatprep.subr.bf16.mxu0 0
        %527 = vmatpush1.bf16.msra.mxu0 0
        %528 = vmatprep.mubr.bf16.mxu0 0
        %529 = vmatmul.mubr.bf16.gmra.mrb[0].mxu0 %v424
        %v530 = vpop.f32.mrb[0].mxu0
        %v531 = vadd.f32 %v446, %v530
        %v532 = vpop.f32.mrb[0].mxu0
        %v533 = vpop.f32.mrb[0].mxu0
        %v534 = vadd.f32 %v446, %v533
        %v535 = vpop.f32.mrb[0].mxu0
        %536 = vdwg.mxu0
        %v537 = vmax.f32 %v531, 0.0
        %v538 = vmax.f32 %v534, 0.0
        %v539 = vxor.u32 %v392, 1336530526
        %v540 = vxor.u32 %v393, 1336530526
        %v541 = vshrl.u32 %v539, 16
        %v542 = vshrl.u32 %v540, 16
        %v543 = vxor.u32 %v539, %v541
        %v544 = vxor.u32 %v540, %v542
        %v545 = vmul.u32 %v543, 2246822507
        %v546 = vmul.u32 %v544, 2246822507
        %v547 = vshrl.u32 %v545, 13
        %v548 = vshrl.u32 %v546, 13
        %v549 = vxor.u32 %v545, %v547
        %v550 = vxor.u32 %v546, %v548
        %v551 = vmul.u32 %v549, 3266489909
        %v552 = vmul.u32 %v550, 3266489909
        %v553 = vshrl.u32 %v551, 16
        %v554 = vshrl.u32 %v552, 16
        %v555 = vxor.u32 %v551, %v553
        %v556 = vxor.u32 %v552, %v554
        %v557 = vshrl.u32 %v555, 8
        %v558 = vshrl.u32 %v556, 8
        %v559 = vcvt.s32.f32 %v557
        %v560 = vcvt.s32.f32 %v558
        %v561 = vmul.f32 %v559, 5.9604645e-08
        %v562 = vmul.f32 %v560, 5.9604645e-08
        %vm563 = vcmp.ge.f32.partialorder %v561, 0.5
        %vm564 = vcmp.ge.f32.partialorder %v562, 0.5
        %v565 = vsel %vm563, 2.0, 0.0
        %v566 = vsel %vm564, 2.0, 0.0
        %v567 = vmul.f32 %v537, %v565
        %v568 = vmul.f32 %v538, %v566
        %v569 = vpack.c.bf16 %v568, %v567
        %v570 = vld [vmem:[#allocation7] sm:$0xf]
        %v571 = vld [vmem:[#allocation7 + $0x4] sm:$0xf]
        %v572 = vld [vmem:[#allocation7 + $0x8] sm:$0xf]
        %v573 = vld [vmem:[#allocation7 + $0xc] sm:$0xf]
        %v574 = vld [vmem:[#allocation7 + $0x10] sm:$0xf]
        %v575 = vld [vmem:[#allocation7 + $0x14] sm:$0xf]
        %v576 = vld [vmem:[#allocation7 + $0x18] sm:$0xf]
        %v577 = vld [vmem:[#allocation7 + $0x1c] sm:$0xf]
        %v578 = vld [vmem:[#allocation7 + $0x20] sm:$0xf]
        %v579 = vld [vmem:[#allocation7 + $0x24] sm:$0xf]
        %v580 = vld [vmem:[#allocation7 + $0x28] sm:$0xf]
        %v581 = vld [vmem:[#allocation7 + $0x2c] sm:$0xf]
        %v582 = vld [vmem:[#allocation7 + $0x30] sm:$0xf]
        %v583 = vld [vmem:[#allocation7 + $0x34] sm:$0xf]
        %v584 = vld [vmem:[#allocation7 + $0x38] sm:$0xf]
        %v585 = vld [vmem:[#allocation7 + $0x3c] sm:$0xf]
        %v586 = vld [vmem:[%s7] sm:$0x1]
        %v588 = vlaneseq
        %v589 = vshrl.u32 %v588, 7
        %v590 = vsub.s32 0, %v589
        %v591 = vrot.slane %v586, %v590
        %v609 = vunpack.c.l.b16 %v570
        %v610 = vunpack.c.l.b16 %v571
        %v611 = vunpack.c.l.b16 %v572
        %v612 = vunpack.c.l.b16 %v573
        %v613 = vunpack.c.l.b16 %v574
        %v614 = vunpack.c.l.b16 %v575
        %v615 = vunpack.c.l.b16 %v576
        %v616 = vunpack.c.l.b16 %v577
        %v617 = vunpack.c.l.b16 %v578
        %v618 = vunpack.c.l.b16 %v579
        %v619 = vunpack.c.l.b16 %v580
        %v620 = vunpack.c.l.b16 %v581
        %v621 = vunpack.c.l.b16 %v582
        %v622 = vunpack.c.l.b16 %v583
        %v623 = vunpack.c.l.b16 %v584
        %v624 = vunpack.c.l.b16 %v585
        %v625 = vpack.c.b16 %v610, %v609
        %v626 = vpack.c.b16 %v612, %v611
        %v627 = vpack.c.b16 %v614, %v613
        %v628 = vpack.c.b16 %v616, %v615
        %v629 = vpack.c.b16 %v618, %v617
        %v630 = vpack.c.b16 %v620, %v619
        %v631 = vpack.c.b16 %v622, %v621
        %v632 = vpack.c.b16 %v624, %v623
        %641 = vmatprep.subr.bf16.mxu0 0
        %642 = vmatpush1.bf16.msra.mxu0 %v625
        %643 = vmatprep.subr.bf16.mxu0 0
        %644 = vmatpush1.bf16.msra.mxu0 %v626
        %645 = vmatprep.subr.bf16.mxu0 0
        %646 = vmatpush1.bf16.msra.mxu0 %v627
        %647 = vmatprep.subr.bf16.mxu0 0
        %648 = vmatpush1.bf16.msra.mxu0 %v628
        %649 = vmatprep.subr.bf16.mxu0 0
        %650 = vmatpush1.bf16.msra.mxu0 %v629
        %651 = vmatprep.subr.bf16.mxu0 0
        %652 = vmatpush1.bf16.msra.mxu0 %v630
        %653 = vmatprep.subr.bf16.mxu0 0
        %654 = vmatpush1.bf16.msra.mxu0 %v631
        %655 = vmatprep.subr.bf16.mxu0 0
        %656 = vmatpush1.bf16.msra.mxu0 %v632
        %657 = vmatprep.subr.bf16.mxu0 0
        %658 = vmatpush1.bf16.msra.mxu0 0
        %659 = vmatprep.subr.bf16.mxu0 0
        %660 = vmatpush1.bf16.msra.mxu0 0
        %661 = vmatprep.subr.bf16.mxu0 0
        %662 = vmatpush1.bf16.msra.mxu0 0
        %663 = vmatprep.subr.bf16.mxu0 0
        %664 = vmatpush1.bf16.msra.mxu0 0
        %665 = vmatprep.subr.bf16.mxu0 0
        %666 = vmatpush1.bf16.msra.mxu0 0
        %667 = vmatprep.subr.bf16.mxu0 0
        %668 = vmatpush1.bf16.msra.mxu0 0
        %669 = vmatprep.subr.bf16.mxu0 0
        %670 = vmatpush1.bf16.msra.mxu0 0
        %671 = vmatprep.subr.bf16.mxu0 0
        %672 = vmatpush1.bf16.msra.mxu0 0
        %673 = vmatprep.mubr.bf16.mxu0 0
        %674 = vmatmul.mubr.bf16.gmra.mrb[0].mxu0 %v569
        %v675 = vpop.f32.mrb[0].mxu0
        %v676 = vadd.f32 %v591, %v675
        %v677 = vpop.f32.mrb[0].mxu0
        %v678 = vpop.f32.mrb[0].mxu0
        %v679 = vadd.f32 %v591, %v678
        %v680 = vpop.f32.mrb[0].mxu0
        %681 = vdwg.mxu0
        %v682 = vmax.f32 %v676, 0.0
        %v683 = vmax.f32 %v679, 0.0
        %v684 = vpack.c.bf16 %v683, %v682
        %v686 = vunpack.c.l.b16 %v684
        %v687 = vunpack.c.h.b16 %v684
        %v688 = vpack.c.b16 %v686, %v686
        %v689 = vpack.c.b16 %v687, %v687
        %692 = vst [vmem:[%s304] sm:$0xf] %v688
        %693 = vst [vmem:[%s304 + $0x4] sm:$0xf] %v689
        %s694 = sand.u32 %s185, 1
        %s695 = scalar_lea.sflag [#allocation6], %s694
        %s696 = sand.u32 %s185, 1
        %s697 = smul.addr %s696, 8
        %s698 = scalar_lea.vmem [#allocation9], %s697
        // Predicated region
        $region57: #{tpu_custom_call.1} parent=47 // pred_check
          %p699 = pneg %p195
        $region58: #{tpu_custom_call.1} parent=47 // pred_check_branch
          %701 = sbr.rel (%p699) target = $region60
        $region59: #{tpu_custom_call.1} parent=47 // pred_region
          %s702 = smul.u32 2, %s25
          %s704 = ssub.s32 128, 128
          %705 = vsyncadd %s695, %s704
          %s706 = smul.addr %s702, 64
          %s707 = scalar_lea.hbm %s8, %s706
          %s708 = sshll.u32 %s698, 4
          %s709 = int_to_ptr.vmem [resolvable:$true] %s708
          %714 = dma.vmem_to_hbm [thread:$0]  %s709, 128, %s707, %s695, 64, 64, 4
        $region60: #{tpu_custom_call.1} parent=47 // pred_fallthru
          _
      $region48: #{tpu_custom_call.1} parent=5 // pred_fallthru
        _
      %p715 = scmp.le.s32.totalorder 2, %s20
      // Predicated region
      $region61: #{tpu_custom_call.1} parent=5 // pred_check
        %p716 = pneg %p715
      $region62: #{tpu_custom_call.1} parent=5 // pred_check_branch
        %718 = sbr.rel (%p716) target = $region64
      $region63: #{tpu_custom_call.1} parent=5 // pred_region
        %s719 = ssub.s32 %s20, 2
        // Predicated region
        $region65: #{tpu_custom_call.1} parent=63 // pred_check
          %p720 = pneg %p201
        $region66: #{tpu_custom_call.1} parent=63 // pred_check_branch
          %722 = sbr.rel (%p720) target = $region68
        $region67: #{tpu_custom_call.1} parent=63 // pred_region
          %s723 = sand.u32 %s186, 1
          %s724 = scalar_lea.sflag [#allocation6], %s723
          %s725 = sand.u32 %s186, 1
          %s726 = smul.addr %s725, 8
          %s727 = scalar_lea.vmem [#allocation9], %s726
          %728 = dma.done %s724, 128
        $region68: #{tpu_custom_call.1} parent=63 // pred_fallthru
          _
      $region64: #{tpu_custom_call.1} parent=5 // pred_fallthru
        _
    $region6: #{tpu_custom_call.1} parent=1 // loop_footer
      %s24 = sadd.s32 1, %s20
    $region7: #{tpu_custom_call.1} parent=1 // loop_footer_branch
      %19 = sbr.rel target = $region3
    $region8: #{tpu_custom_call.1} parent=1 // loop_exit
      _
    %729 = vsyncpa [#allocation5], 1
    %s730 = scalar_lea.sflag [#allocation5], 1
    %731 = vsyncpa %s730, 1
    %732 = vsyncpa [#allocation8], 1
    %733 = vsyncpa [#allocation6], 1
    %s734 = scalar_lea.sflag [#allocation6], 1
    %735 = vsyncpa %s734, 1

</llo_original>
